<compile_context>
chip_gen: v7x
topology: tpu7x:2x2x1
jax: 0.10.0
libtpu: 0.0.40
codegen_flags: <defaults>
</compile_context>

<pallas_src>
import functools

import jax
import jax.numpy as jnp
from jax.experimental import pallas as pl
from jax.experimental.pallas import tpu as pltpu


# ----------------------------------------------------------------------------------
# Chip-generation-aware configuration.
# ----------------------------------------------------------------------------------
@functools.lru_cache(maxsize=1)
def _chip_config():
    kind = ""
    try:
        kind = (jax.devices()[0].device_kind or "").lower()
    except Exception:
        pass
    if "v7" in kind or "tpu7" in kind:
        # v7x: only 64 MiB VMEM per TensorCore, 2 TCs per chip -> cap well under 64 MiB.
        return {"tile_budget": 12 << 20, "vmem_limit": 48 << 20, "cores": 2}
    if "v6" in kind:
        # v6e: 128 MiB physical VMEM, 32 MiB default scoped -> raise it, big tiles.
        return {"tile_budget": 14 << 20, "vmem_limit": 64 << 20, "cores": 1}
    if "v5" in kind or "v4" in kind:
        # v5e/v5p/v4: modest tiles; don't raise the scoped limit aggressively.
        return {"tile_budget": 5 << 20, "vmem_limit": 32 << 20, "cores": 1}
    # Unknown chip: fit comfortably in a 16 MiB default scoped VMEM.
    return {"tile_budget": 4 << 20, "vmem_limit": None, "cores": 1}


# ----------------------------------------------------------------------------------
# Spatial tile selection.
# ----------------------------------------------------------------------------------
def _pick_hw_block(hw, c, itemsize, budget_bytes):
    """Return (tblk, n_steps, rem).

    rem == 0 means tblk evenly divides hw; otherwise the last tile is ragged and
    only its first `rem` lanes are valid (kernel masks them).
    """
    row_bytes = c * itemsize
    if hw <= 128 or hw * row_bytes <= budget_bytes:
        return hw, 1, 0                                   # single full-extent tile

    # Largest multiple of 128 lanes whose (C, tblk) slab fits the budget.
    max_t = max(128, (budget_bytes // (row_bytes * 128)) * 128)
    max_t = min(max_t, (hw // 128) * 128)

    # Minimum contiguous DMA run of ~2 KiB per channel row (dtype dependent).
    min_t = min(max_t, ((2048 + 128 * itemsize - 1) // (128 * itemsize)) * 128)

    # Prefer a tile that divides hw exactly (no masking), any multiple of 128,
    # unless it costs more grid steps or falls below the minimum run length.
    div_t = None
    t = max_t
    while t >= 128:
        if hw % t == 0:
            div_t = t
            break
        t -= 128

    steps_ragged = -(-hw // max_t)
    if div_t is not None and div_t >= min_t and hw // div_t <= steps_ragged:
        return div_t, hw // div_t, 0
    return max_t, steps_ragged, hw % max_t


def _x_block_spec(block_shape, index_map, buffers):
    """Input BlockSpec, optionally with 3-deep buffering when VMEM headroom allows."""
    if buffers > 2 and hasattr(pl, "Buffered"):
        try:
            return pl.BlockSpec(block_shape, index_map,
                                pipeline_mode=pl.Buffered(int(buffers)))
        except TypeError:  # older API without pipeline_mode
            pass
    return pl.BlockSpec(block_shape, index_map)


# ----------------------------------------------------------------------------------
# Shared accumulation: f32 running sum + native-dtype max, masked ragged last tile.
# ----------------------------------------------------------------------------------
def _accumulate_tile(x, sum_sc, max_sc, *, rem, is_ragged_last):
    def _do(x_sum, x_max):
        sum_sc[...] += jnp.sum(x_sum, axis=-1, keepdims=True, dtype=jnp.float32)
        max_sc[...] = jnp.maximum(
            max_sc[...],
            jnp.max(x_max, axis=-1, keepdims=True).astype(jnp.float32))

    if rem == 0:
        _do(x, x)
    else:
        @pl.when(jnp.logical_not(is_ragged_last))
        def _full():
            _do(x, x)

        @pl.when(is_ragged_last)
        def _ragged():
            lane = jax.lax.broadcasted_iota(jnp.int32, x.shape, 1)
            keep = lane < rem
            _do(jnp.where(keep, x, jnp.zeros_like(x)),
                jnp.where(keep, x, jnp.full_like(x, -jnp.inf)))


# ----------------------------------------------------------------------------------
# Path A: fully fused kernel (pool + MLP + sigmoid), grid = (N, spatial tiles).
# ----------------------------------------------------------------------------------
def _ca_fused_kernel(x_ref, w1_ref, w2_ref, o_ref, sum_sc, max_sc, *, total_hw, rem):
    hw = pl.program_id(1)
    is_last = hw == pl.num_programs(1) - 1

    @pl.when(hw == 0)
    def _init():
        sum_sc[...] = jnp.zeros_like(sum_sc)
        max_sc[...] = jnp.full_like(max_sc, -jnp.inf)

    _accumulate_tile(x_ref[0], sum_sc, max_sc, rem=rem, is_ragged_last=is_last)

    @pl.when(is_last)
    def _finalize():
        avg = sum_sc[...] * (1.0 / float(total_hw))              # (C, 1) f32
        mx = max_sc[...]                                         # (C, 1) f32
        pooled = jnp.concatenate([avg, mx], axis=1)              # (C, 2)
        w1 = w1_ref[...].astype(jnp.float32)                     # (Cr, C)
        w2 = w2_ref[...].astype(jnp.float32)                     # (C, Cr)
        # One batched fc1 over both pooled vectors, then ReLU.
        h = jnp.maximum(jnp.dot(w1, pooled, preferred_element_type=jnp.float32), 0.0)
        h = h[:, 0:1] + h[:, 1:2]                                # (Cr, 1)
        # fc2 is bias-free => fc2(a)+fc2(b) == fc2(a+b).
        logit = jnp.dot(w2, h, preferred_element_type=jnp.float32)   # (C, 1)
        o_ref[0] = 1.0 / (1.0 + jnp.exp(-logit))


# ----------------------------------------------------------------------------------
# Path B: partial pooling kernel for a spatial split across TensorCores (v7x, small N).
# Grid = (N, P, steps_per_part); combine + MLP happen in the wrapper (negligible work).
# ----------------------------------------------------------------------------------
def _ca_pool_partial_kernel(x_ref, sum_ref, max_ref, sum_sc, max_sc, *,
                            total_steps, steps_per_part, rem):
    p = pl.program_id(1)
    h = pl.program_id(2)
    step = p * steps_per_part + h

    @pl.when(h == 0)
    def _init():
        sum_sc[...] = jnp.zeros_like(sum_sc)
        max_sc[...] = jnp.full_like(max_sc, -jnp.inf)

    @pl.when(step < total_steps)
    def _acc():
        _accumulate_tile(x_ref[0], sum_sc, max_sc, rem=rem,
                         is_ragged_last=(step == total_steps - 1))

    @pl.when(h == steps_per_part - 1)
    def _fin():
        sum_ref[0, 0] = sum_sc[...]
        max_ref[0, 0] = max_sc[...]


# ----------------------------------------------------------------------------------
# Wrapper.
# ----------------------------------------------------------------------------------
def channel_attention(x_nchw, w_fc1, w_fc2, *, tile_budget_bytes=None, spatial_split=None):
    """PyTorch ChannelAttention forward.

    x_nchw: (N, C, H, W)
    w_fc1 : (C//16, C)   == Conv2d(C, C//16, 1, bias=False).weight[:, :, 0, 0]
    w_fc2 : (C, C//16)   == Conv2d(C//16, C, 1, bias=False).weight[:, :, 0, 0]
    returns (N, C, 1, 1) sigmoid attention weights (f32).
    """
    N, C, H, W = x_nchw.shape
    Cr = w_fc1.shape[0]
    HW = H * W
    itemsize = jnp.dtype(x_nchw.dtype).itemsize

    cfg = _chip_config()
    budget = tile_budget_bytes if tile_budget_bytes is not None else cfg["tile_budget"]
    vmem_limit = cfg["vmem_limit"]

    x3 = x_nchw.reshape(N, C, HW)                                # free reshape
    tblk, n_steps, rem = _pick_hw_block(HW, C, itemsize, budget)

    # Spend leftover VMEM on a third input buffer only when it actually helps.
    tile_bytes = C * tblk * itemsize
    buffers = 3 if (vmem_limit is not None and n_steps >= 4
                    and 3 * tile_bytes + (4 << 20) <= vmem_limit) else 2

    split = spatial_split
    if split is None:
        split = cfg["cores"] if (cfg["cores"] > 1 and N < cfg["cores"]) else 1
    split = max(1, min(int(split), n_steps))

    cost = pl.CostEstimate(
        flops=4 * N * C * HW,
        transcendentals=N * C,
        bytes_accessed=N * C * HW * itemsize
        + (w_fc1.size + w_fc2.size) * jnp.dtype(w_fc1.dtype).itemsize
        + N * C * 4,
    )

    if split == 1:
        kernel = functools.partial(_ca_fused_kernel, total_hw=HW, rem=rem)
        out = pl.pallas_call(
            kernel,
            out_shape=jax.ShapeDtypeStruct((N, C, 1), jnp.float32),
            grid=(N, n_steps),
            in_specs=[
                _x_block_spec((1, C, tblk), lambda n, h: (n, 0, h), buffers),
                pl.BlockSpec((Cr, C), lambda n, h: (0, 0)),
                pl.BlockSpec((C, Cr), lambda n, h: (0, 0)),
            ],
            out_specs=pl.BlockSpec((1, C, 1), lambda n, h: (n, 0, 0)),
            scratch_shapes=[pltpu.VMEM((C, 1), jnp.float32),   # running sum
                            pltpu.VMEM((C, 1), jnp.float32)],  # running max
            compiler_params=pltpu.CompilerParams(
                dimension_semantics=("parallel", "arbitrary"),
                vmem_limit_bytes=vmem_limit),
            cost_estimate=cost,
        )(x3, w_fc1, w_fc2)
        return out.reshape(N, C, 1, 1)

    # ---- split path: per-core partial pooling (keeps both v7x TCs busy) ----
    spp = pl.cdiv(n_steps, split)
    kernel = functools.partial(_ca_pool_partial_kernel,
                               total_steps=n_steps, steps_per_part=spp, rem=rem)

    def x_idx(n, p, h):
        # Clamp steps past the end (uneven split): DMA is redundant but the
        # kernel skips their accumulation.
        return (n, 0, jnp.minimum(p * spp + h, n_steps - 1))

    part_sum, part_max = pl.pallas_call(
        kernel,
        out_shape=(jax.ShapeDtypeStruct((N, split, C, 1), jnp.float32),
                   jax.ShapeDtypeStruct((N, split, C, 1), jnp.float32)),
        grid=(N, split, spp),
        in_specs=[_x_block_spec((1, C, tblk), x_idx, buffers)],
        out_specs=(pl.BlockSpec((1, 1, C, 1), lambda n, p, h: (n, p, 0, 0)),
                   pl.BlockSpec((1, 1, C, 1), lambda n, p, h: (n, p, 0, 0))),
        scratch_shapes=[pltpu.VMEM((C, 1), jnp.float32),
                        pltpu.VMEM((C, 1), jnp.float32)],
        compiler_params=pltpu.CompilerParams(
            dimension_semantics=("parallel", "parallel", "arbitrary"),
            vmem_limit_bytes=vmem_limit),
        cost_estimate=cost,
    )(x3)

    avg = part_sum.sum(axis=1)[..., 0] * (1.0 / float(HW))      # (N, C)
    mx = part_max.max(axis=1)[..., 0]                           # (N, C)
    w1 = w_fc1.astype(jnp.float32)
    w2 = w_fc2.astype(jnp.float32)
    h = jnp.maximum(avg @ w1.T, 0.0) + jnp.maximum(mx @ w1.T, 0.0)   # (N, Cr)
    out = 1.0 / (1.0 + jnp.exp(-(h @ w2.T)))                         # (N, C)
    return out.reshape(N, C, 1, 1)


# ----------------------------------------------------------------------------------
# Pure-JAX reference (mirrors the PyTorch module exactly).
# ----------------------------------------------------------------------------------
def channel_attention_ref(x, w_fc1, w_fc2):
    avg = jnp.mean(x, axis=(2, 3))                               # (N, C)
    mx = jnp.max(x, axis=(2, 3))                                 # (N, C)

    def mlp(v):
        h = jnp.maximum(v @ w_fc1.T, 0.0)                        # (N, Cr)
        return h @ w_fc2.T                                       # (N, C)

    logit = mlp(avg) + mlp(mx)
    out = 1.0 / (1.0 + jnp.exp(-logit))
    return out.reshape(*out.shape, 1, 1)


if __name__ == "__main__":
    key = jax.random.PRNGKey(0)
    kx, k1, k2 = jax.random.split(key, 3)

    def make_inputs(n, c, h, w, dtype):
        cr = c // 16
        x = jax.random.normal(kx, (n, c, h, w), jnp.float32).astype(dtype)
        w1 = jax.random.normal(k1, (cr, c), jnp.float32) * (1.0 / c ** 0.5)
        w2 = jax.random.normal(k2, (c, cr), jnp.float32) * (1.0 / cr ** 0.5)
        return x, w1, w2

    def check(name, out, x, w1, w2, atol):
        ref = channel_attention_ref(x.astype(jnp.float32), w1, w2)
        assert out.shape == ref.shape, (name, out.shape, ref.shape)
        assert bool(jnp.all(jnp.isfinite(out))), name
        err = float(jnp.max(jnp.abs(out.astype(jnp.float32) - ref)))
        assert err <= atol, (name, err)

    # 1) Default chip-aware config (single-tile fused path), f32.
    x, w1, w2 = make_inputs(2, 64, 16, 16, jnp.float32)
    out = jax.block_until_ready(jax.jit(channel_attention)(x, w1, w2))
    check("fused", out, x, w1, w2, 3e-5)

    # 2) Forced small tile budget -> multi-step streaming with a masked ragged
    #    last tile (H*W = 400 is not a multiple of 128).
    x, w1, w2 = make_inputs(2, 32, 20, 20, jnp.float32)
    fwd = jax.jit(functools.partial(channel_attention, tile_budget_bytes=32 * 1024))
    out = jax.block_until_ready(fwd(x, w1, w2))
    check("ragged", out, x, w1, w2, 3e-5)

    # 3) v7x-style dual-TensorCore spatial split (forced so the path is exercised
    #    on any chip): partial-pool kernel + tiny MLP in the wrapper; also covers
    #    the clamped/skipped tail step of an uneven split.
    x, w1, w2 = make_inputs(1, 32, 26, 26, jnp.float32)
    fwd = jax.jit(functools.partial(channel_attention, tile_budget_bytes=32 * 1024,
                                    spatial_split=2))
    out = jax.block_until_ready(fwd(x, w1, w2))
    check("split", out, x, w1, w2, 3e-5)

    # 4) bf16 activations: native-dtype max path, f32-accumulated sum.
    x, w1, w2 = make_inputs(2, 64, 16, 16, jnp.bfloat16)
    out = jax.block_until_ready(jax.jit(channel_attention)(x, w1, w2))
    check("bf16", out, x, w1, w2, 1e-3)

    print("KERNEL_OK")
</pallas_src>

<mosaic_0001>
module attributes {stable_mosaic.version = 11 : i64} {
  func.func @_ca_fused_kernel(%arg0: i32, %arg1: i32, %arg2: memref<1x64x256xf32, #tpu.memory_space<vmem>>, %arg3: memref<4x64xf32, #tpu.memory_space<vmem>>, %arg4: memref<64x4xf32, #tpu.memory_space<vmem>>, %arg5: memref<1x64x1xf32, #tpu.memory_space<vmem>>, %arg6: memref<64x1xf32, #tpu.memory_space<vmem>>, %arg7: memref<64x1xf32, #tpu.memory_space<vmem>>) attributes {dimension_semantics = [#tpu.dimension_semantics<parallel>, #tpu.dimension_semantics<arbitrary>], iteration_bounds = array<i64: 2, 1>, scalar_prefetch = 0 : i64, scratch_operands = 2 : i64, tpu.core_type = #tpu.core_type<tc>, window_params = [{transform_indices = @transform_0, window_bounds = array<i64: 1, 64, 256>}, {pipeline_mode = #tpu.pipeline_mode<synchronous>, transform_indices = @transform_1, window_bounds = array<i64: 4, 64>}, {pipeline_mode = #tpu.pipeline_mode<synchronous>, transform_indices = @transform_2, window_bounds = array<i64: 64, 4>}, {transform_indices = @transform_3, window_bounds = array<i64: 1, 64, 1>}]} {
    %c0_i32 = arith.constant 0 : i32
    %0 = arith.cmpi eq, %arg1, %c0_i32 : i32
    %c0_i32_0 = arith.constant 0 : i32
    %1 = arith.cmpi eq, %arg1, %c0_i32_0 : i32
    %2 = arith.extui %1 : i1 to i32
    %c0_i32_1 = arith.constant 0 : i32
    %3 = arith.cmpi ne, %2, %c0_i32_1 : i32
    scf.if %3 {
      %cst_14 = arith.constant 0.000000e+00 : f32
      %18 = vector.broadcast %cst_14 : f32 to vector<64x1xf32>
      %c0_15 = arith.constant 0 : index
      %c0_16 = arith.constant 0 : index
      %19 = vector.load %arg6[%c0_15, %c0_16] : memref<64x1xf32, #tpu.memory_space<vmem>>, vector<64x1xf32>
      tpu.vector_store %arg6[%c0_15, %c0_16], %18 {strides = array<i32>} : memref<64x1xf32, #tpu.memory_space<vmem>>, vector<64x1xf32>,
      %cst_17 = arith.constant 0xFF800000 : f32
      %20 = vector.broadcast %cst_17 : f32 to vector<64x1xf32>
      %c0_18 = arith.constant 0 : index
      %c0_19 = arith.constant 0 : index
      %21 = vector.load %arg7[%c0_18, %c0_19] : memref<64x1xf32, #tpu.memory_space<vmem>>, vector<64x1xf32>
      tpu.vector_store %arg7[%c0_18, %c0_19], %20 {strides = array<i32>} : memref<64x1xf32, #tpu.memory_space<vmem>>, vector<64x1xf32>,
    } else {
    }
    %c0 = arith.constant 0 : index
    %c0_2 = arith.constant 0 : index
    %c0_3 = arith.constant 0 : index
    %4 = vector.load %arg2[%c0, %c0_2, %c0_3] : memref<1x64x256xf32, #tpu.memory_space<vmem>>, vector<1x64x256xf32>
    %5 = vector.shape_cast %4 : vector<1x64x256xf32> to vector<64x256xf32>
    %c0_4 = arith.constant 0 : index
    %c0_5 = arith.constant 0 : index
    %6 = vector.load %arg6[%c0_4, %c0_5] : memref<64x1xf32, #tpu.memory_space<vmem>>, vector<64x1xf32>
    %cst = arith.constant dense<0.000000e+00> : vector<64xf32>
    %7 = vector.multi_reduction <add>, %5, %cst [1] : vector<64x256xf32> to vector<64xf32>
    %8 = vector.shape_cast %7 : vector<64xf32> to vector<64x1xf32>
    %9 = arith.addf %6, %8 : vector<64x1xf32>
    %c0_6 = arith.constant 0 : index
    %c0_7 = arith.constant 0 : index
    %10 = vector.load %arg6[%c0_6, %c0_7] : memref<64x1xf32, #tpu.memory_space<vmem>>, vector<64x1xf32>
    tpu.vector_store %arg6[%c0_6, %c0_7], %9 {strides = array<i32>} : memref<64x1xf32, #tpu.memory_space<vmem>>, vector<64x1xf32>,
    %c0_8 = arith.constant 0 : index
    %c0_9 = arith.constant 0 : index
    %11 = vector.load %arg7[%c0_8, %c0_9] : memref<64x1xf32, #tpu.memory_space<vmem>>, vector<64x1xf32>
    %cst_10 = arith.constant dense<0xFF800000> : vector<64xf32>
    %12 = vector.multi_reduction <maximumf>, %5, %cst_10 [1] : vector<64x256xf32> to vector<64xf32>
    %13 = vector.shape_cast %12 : vector<64xf32> to vector<64x1xf32>
    %14 = arith.maximumf %11, %13 : vector<64x1xf32>
    %c0_11 = arith.constant 0 : index
    %c0_12 = arith.constant 0 : index
    %15 = vector.load %arg7[%c0_11, %c0_12] : memref<64x1xf32, #tpu.memory_space<vmem>>, vector<64x1xf32>
    tpu.vector_store %arg7[%c0_11, %c0_12], %14 {strides = array<i32>} : memref<64x1xf32, #tpu.memory_space<vmem>>, vector<64x1xf32>,
    %16 = arith.extui %0 : i1 to i32
    %c0_i32_13 = arith.constant 0 : i32
    %17 = arith.cmpi ne, %16, %c0_i32_13 : i32
    scf.if %17 {
      %c0_14 = arith.constant 0 : index
      %c0_15 = arith.constant 0 : index
      %18 = vector.load %arg6[%c0_14, %c0_15] : memref<64x1xf32, #tpu.memory_space<vmem>>, vector<64x1xf32>
      %cst_16 = arith.constant 3.906250e-03 : f32
      %19 = vector.broadcast %cst_16 : f32 to vector<64x1xf32>
      %20 = arith.mulf %18, %19 : vector<64x1xf32>
      %c0_17 = arith.constant 0 : index
      %c0_18 = arith.constant 0 : index
      %21 = vector.load %arg7[%c0_17, %c0_18] : memref<64x1xf32, #tpu.memory_space<vmem>>, vector<64x1xf32>
      %22 = tpu.concatenate %20, %21 in 1 : vector<64x1xf32>, vector<64x1xf32> -> vector<64x2xf32>
      %c0_19 = arith.constant 0 : index
      %c0_20 = arith.constant 0 : index
      %23 = vector.load %arg3[%c0_19, %c0_20] : memref<4x64xf32, #tpu.memory_space<vmem>>, vector<4x64xf32>
      %c0_21 = arith.constant 0 : index
      %c0_22 = arith.constant 0 : index
      %24 = vector.load %arg4[%c0_21, %c0_22] : memref<64x4xf32, #tpu.memory_space<vmem>>, vector<64x4xf32>
      %cst_23 = arith.constant dense<0.000000e+00> : vector<4x2xf32>
      %25 = tpu.matmul %23, %22, %cst_23 {dimension_numbers = #tpu.dot_dimension_numbers<[1], [0], [0], [1], [0, 0, 1, 1], [], []>} : vector<4x64xf32>, vector<64x2xf32>, vector<4x2xf32> -> vector<4x2xf32>
      %cst_24 = arith.constant 0.000000e+00 : f32
      %26 = vector.broadcast %cst_24 : f32 to vector<4x2xf32>
      %27 = arith.maximumf %25, %26 : vector<4x2xf32>
      %28 = vector.extract_strided_slice %27 {offsets = [0, 0], sizes = [4, 1], strides = [1, 1]} : vector<4x2xf32> to vector<4x1xf32>
      %29 = vector.extract_strided_slice %27 {offsets = [0, 1], sizes = [4, 1], strides = [1, 1]} : vector<4x2xf32> to vector<4x1xf32>
      %30 = arith.addf %28, %29 : vector<4x1xf32>
      %cst_25 = arith.constant dense<0.000000e+00> : vector<64x1xf32>
      %31 = tpu.matmul %24, %30, %cst_25 {dimension_numbers = #tpu.dot_dimension_numbers<[1], [0], [0], [1], [0, 0, 1, 1], [], []>} : vector<64x4xf32>, vector<4x1xf32>, vector<64x1xf32> -> vector<64x1xf32>
      %cst_26 = arith.constant 0.000000e+00 : f32
      %32 = vector.broadcast %cst_26 : f32 to vector<64x1xf32>
      %33 = arith.subf %32, %31 : vector<64x1xf32>
      %34 = math.exp %33 : vector<64x1xf32>
      %cst_27 = arith.constant 1.000000e+00 : f32
      %35 = vector.broadcast %cst_27 : f32 to vector<64x1xf32>
      %36 = arith.addf %35, %34 : vector<64x1xf32>
      %cst_28 = arith.constant 1.000000e+00 : f32
      %37 = vector.broadcast %cst_28 : f32 to vector<64x1xf32>
      %38 = arith.divf %37, %36 : vector<64x1xf32>
      %c0_29 = arith.constant 0 : index
      %c0_30 = arith.constant 0 : index
      %c0_31 = arith.constant 0 : index
      %39 = vector.load %arg5[%c0_29, %c0_30, %c0_31] : memref<1x64x1xf32, #tpu.memory_space<vmem>>, vector<1x64x1xf32>
      %40 = vector.shape_cast %39 : vector<1x64x1xf32> to vector<64x1xf32>
      %41 = vector.shape_cast %38 : vector<64x1xf32> to vector<1x64x1xf32>
      tpu.vector_store %arg5[%c0_29, %c0_30, %c0_31], %41 {strides = array<i32>} : memref<1x64x1xf32, #tpu.memory_space<vmem>>, vector<1x64x1xf32>,
    } else {
    }
    return
  }
  func.func @transform_0(%arg0: i32, %arg1: i32) -> (i32, i32, i32) {
    %c0_i32 = arith.constant 0 : i32
    %c0_i32_0 = arith.constant 0 : i32
    return %arg0, %c0_i32, %arg1 : i32, i32, i32
  }
  func.func @transform_1(%arg0: i32, %arg1: i32) -> (i32, i32) {
    %c0_i32 = arith.constant 0 : i32
    %c0_i32_0 = arith.constant 0 : i32
    %c0_i32_1 = arith.constant 0 : i32
    return %c0_i32, %c0_i32_0 : i32, i32
  }
  func.func @transform_2(%arg0: i32, %arg1: i32) -> (i32, i32) {
    %c0_i32 = arith.constant 0 : i32
    %c0_i32_0 = arith.constant 0 : i32
    %c0_i32_1 = arith.constant 0 : i32
    return %c0_i32, %c0_i32_0 : i32, i32
  }
  func.func @transform_3(%arg0: i32, %arg1: i32) -> (i32, i32, i32) {
    %c0_i32 = arith.constant 0 : i32
    %c0_i32_0 = arith.constant 0 : i32
    %c0_i32_1 = arith.constant 0 : i32
    return %arg0, %c0_i32, %c0_i32_0 : i32, i32, i32
  }
}

</mosaic_0001>

<llo_original>
// kernel: channel_attention.1
$region0: #{channel_attention.1}
  #allocation0 [shape = 'u32[]', space=smem, size = 0x4, offset = 0x4, fixed_abs, tag = 'smem constant byte address 0x4 - core index']
  #allocation1 [shape = 'u32[144,128]{1,0:T(1,128)}', space=vmem, size = 0x12000, scoped, tag = 'internal scratch']
  #allocation2 [shape = 'f32[64,1]{1,0:T(8,128)}', space=vmem, size = 0x8000, scoped, tag = 'scratch operand']
  #allocation3 [shape = 'f32[64,1]{1,0:T(8,128)}', space=vmem, size = 0x8000, scoped, tag = 'scratch operand']
  %s0 = inlined_call_operand.vmem [shape: f32[2,64,256], index: 0, kind: input, shape index: {}]
  %s1 = inlined_call_operand.vmem [shape: f32[4,64], index: 1, kind: input, shape index: {}]
  %s2 = inlined_call_operand.vmem [shape: f32[64,4], index: 2, kind: input, shape index: {}]
  %s3 = inlined_call_operand.vmem [shape: f32[2,64,1], index: 3, kind: output, shape index: {}]
  %s4 = sld [smem:[#allocation0]]
  $region53: #{channel_attention.1} parent=0
    _
  %s6 = ssub.s32 1, %s4
  %s7 = scalar_select 0, %s6, %s4
  loop: start=0, step=1, limit=4
  $region2: #{channel_attention.1} parent=0 // loop_pre_header
    _
  $region3: #{channel_attention.1} parent=0 // loop_header
    %s9 = sphi 0, %s13
    %p10 = scmp.ge.s32.totalorder %s9, 4
    %s16 = sphi 0, %s28
    %s17 = sphi 0, %s24
    %s18 = sphi 0, %s16
    %s19 = sphi 0, %s17
    %s20 = sphi 0, %s18
    %s21 = sphi 0, %s19
    %s33 = sphi 0, %s35
    %s36 = sphi 0, %s33
    %s37 = sphi 0, %s36
    %s53 = sphi 0, %s37
    %s57 = sphi 0, %s57
    %s59 = sphi 0, %s57
    %s60 = sphi 0, %s59
    %s74 = sphi 0, %s60
    %s78 = sphi 0, %s78
    %s80 = sphi 0, %s78
    %s81 = sphi 0, %s80
    %s95 = sphi 0, %s81
    %s101 = sphi 0, %s103
    %s104 = sphi 0, %s101
    %s105 = sphi 0, %s104
    %s121 = sphi 0, %s105
  $region4: #{channel_attention.1} parent=0 // loop_header_branch
    %12 = sbr.rel (%p10) target = $region8
  $region5: #{channel_attention.1} parent=0 // loop_body
    %s14 = ssub.s32 %s9, 1
    %s15 = ssub.s32 %s9, 2
    %s22 = sadd.s32 1, %s17
    %p23 = scmp.ge.s32.totalorder %s22, 1
    %s24 = scalar_select %p23, 0, %s22
    %s25 = sadd.s32 1, %s16
    %s26 = scalar_select %p23, %s25, %s16
    %p27 = scmp.ge.s32.totalorder %s26, 2
    %s28 = scalar_select %p27, 0, %s26
    %s29 = ssub.s32 %s16, %s28
    %s30 = ssub.s32 %s17, %s24
    %s31 = sor.u32 %s29, %s30
    %p32 = scmp.eq.s32.totalorder %s31, 0
    %s34 = sadd.s32 %s33, 1
    %s35 = scalar_select %p32, %s33, %s34
    %p38 = pneg %p32
    %p39 = scmp.eq.s32.totalorder %s9, 1
    %p40 = por %p38, %p39
    %p41 = scmp.ne.s32.totalorder %s33, %s36
    %p42 = scmp.eq.s32.totalorder %s9, 0
    %p43 = por %p41, %p42
    %p44 = scmp.ne.s32.totalorder %s33, %s36
    %p45 = scmp.eq.s32.totalorder %s14, 1
    %p46 = por %p44, %p45
    %p47 = scmp.ne.s32.totalorder %s36, %s37
    %p48 = scmp.eq.s32.totalorder %s14, 0
    %p49 = por %p47, %p48
    %p50 = scmp.ne.s32.totalorder %s36, %s37
    %p51 = scmp.eq.s32.totalorder %s15, 1
    %p52 = por %p50, %p51
    %p54 = scmp.ne.s32.totalorder %s37, %s53
    %p55 = scmp.eq.s32.totalorder %s15, 0
    %p56 = por %p54, %p55
    %s58 = sadd.s32 %s57, 1
    %p61 = scmp.eq.s32.totalorder %s9, 1
    %p62 = scmp.ne.s32.totalorder %s57, %s59
    %p63 = scmp.eq.s32.totalorder %s9, 0
    %p64 = por %p62, %p63
    %p65 = scmp.ne.s32.totalorder %s57, %s59
    %p66 = scmp.eq.s32.totalorder %s14, 1
    %p67 = por %p65, %p66
    %p68 = scmp.ne.s32.totalorder %s59, %s60
    %p69 = scmp.eq.s32.totalorder %s14, 0
    %p70 = por %p68, %p69
    %p71 = scmp.ne.s32.totalorder %s59, %s60
    %p72 = scmp.eq.s32.totalorder %s15, 1
    %p73 = por %p71, %p72
    %p75 = scmp.ne.s32.totalorder %s60, %s74
    %p76 = scmp.eq.s32.totalorder %s15, 0
    %p77 = por %p75, %p76
    %s79 = sadd.s32 %s78, 1
    %p82 = scmp.eq.s32.totalorder %s9, 1
    %p83 = scmp.ne.s32.totalorder %s78, %s80
    %p84 = scmp.eq.s32.totalorder %s9, 0
    %p85 = por %p83, %p84
    %p86 = scmp.ne.s32.totalorder %s78, %s80
    %p87 = scmp.eq.s32.totalorder %s14, 1
    %p88 = por %p86, %p87
    %p89 = scmp.ne.s32.totalorder %s80, %s81
    %p90 = scmp.eq.s32.totalorder %s14, 0
    %p91 = por %p89, %p90
    %p92 = scmp.ne.s32.totalorder %s80, %s81
    %p93 = scmp.eq.s32.totalorder %s15, 1
    %p94 = por %p92, %p93
    %p96 = scmp.ne.s32.totalorder %s81, %s95
    %p97 = scmp.eq.s32.totalorder %s15, 0
    %p98 = por %p96, %p97
    %s99 = ssub.s32 %s16, %s28
    %p100 = scmp.eq.s32.totalorder %s99, 0
    %s102 = sadd.s32 %s101, 1
    %s103 = scalar_select %p100, %s101, %s102
    %p106 = pneg %p100
    %p107 = scmp.eq.s32.totalorder %s9, 1
    %p108 = por %p106, %p107
    %p109 = scmp.ne.s32.totalorder %s101, %s104
    %p110 = scmp.eq.s32.totalorder %s9, 0
    %p111 = por %p109, %p110
    %p112 = scmp.ne.s32.totalorder %s101, %s104
    %p113 = scmp.eq.s32.totalorder %s14, 1
    %p114 = por %p112, %p113
    %p115 = scmp.ne.s32.totalorder %s104, %s105
    %p116 = scmp.eq.s32.totalorder %s14, 0
    %p117 = por %p115, %p116
    %p118 = scmp.ne.s32.totalorder %s104, %s105
    %p119 = scmp.eq.s32.totalorder %s15, 1
    %p120 = por %p118, %p119
    %p122 = scmp.ne.s32.totalorder %s105, %s121
    %p123 = scmp.eq.s32.totalorder %s15, 0
    %p124 = por %p122, %p123
    %p125 = scmp.le.s32.totalorder 1, %s9
    %p126 = scmp.lt.s32.totalorder %s9, 3
    %p127 = pnand %p125, %p126
    %p128 = pneg %p127
    // Predicated region
    $region9: #{channel_attention.1} parent=5 // pred_check
      _
    $region10: #{channel_attention.1} parent=5 // pred_check_branch
      %130 = sbr.rel (%p127) target = $region12
    $region11: #{channel_attention.1} parent=5 // pred_region
      %s131 = ssub.s32 %s9, 1
      // Predicated region
      $region13: #{channel_attention.1} parent=11 // pred_check
        %p132 = pneg %p70
      $region14: #{channel_attention.1} parent=11 // pred_check_branch
        %134 = sbr.rel (%p132) target = $region16
      $region15: #{channel_attention.1} parent=11 // pred_region
        _
      $region16: #{channel_attention.1} parent=11 // pred_fallthru
        _
      // Predicated region
      $region17: #{channel_attention.1} parent=11 // pred_check
        %p135 = pneg %p91
      $region18: #{channel_attention.1} parent=11 // pred_check_branch
        %137 = sbr.rel (%p135) target = $region20
      $region19: #{channel_attention.1} parent=11 // pred_region
        _
      $region20: #{channel_attention.1} parent=11 // pred_fallthru
        _
    $region12: #{channel_attention.1} parent=5 // pred_fallthru
      _
    %p138 = scmp.lt.s32.totalorder %s9, 2
    // Predicated region
    $region21: #{channel_attention.1} parent=5 // pred_check
      %p139 = pneg %p138
    $region22: #{channel_attention.1} parent=5 // pred_check_branch
      %141 = sbr.rel (%p139) target = $region24
    $region23: #{channel_attention.1} parent=5 // pred_region
      // Predicated region
      $region25: #{channel_attention.1} parent=23 // pred_check
        %p142 = pneg %p43
      $region26: #{channel_attention.1} parent=23 // pred_check_branch
        %144 = sbr.rel (%p142) target = $region28
      $region27: #{channel_attention.1} parent=23 // pred_region
        %s145 = smul.u32 2, %s17
        %p146 = scmp.lt.s32.totalorder %s16, 1
        %s147 = scalar_select %p146, %s16, 1
        %p148 = scmp.lt.s32.totalorder %s145, 1
        %s149 = scalar_select %p148, %s145, 1
        %s150 = smul.addr %s147, 16
        %s151 = sadd.s32 %s149, %s150
        %s152 = smul.addr %s151, 8
        %s153 = scalar_lea.vmem %s0, %s152
        %s154 = smul.u32 2, %s17
      $region28: #{channel_attention.1} parent=23 // pred_fallthru
        _
    $region24: #{channel_attention.1} parent=5 // pred_fallthru
      _
    %p155 = scmp.le.s32.totalorder 1, %s9
    %p156 = scmp.lt.s32.totalorder %s9, 3
    %p157 = pnand %p155, %p156
    %p158 = pneg %p157
    // Predicated region
    $region29: #{channel_attention.1} parent=5 // pred_check
      _
    $region30: #{channel_attention.1} parent=5 // pred_check_branch
      %160 = sbr.rel (%p157) target = $region32
    $region31: #{channel_attention.1} parent=5 // pred_region
      %s161 = ssub.s32 %s9, 1
      %s162 = smul.u32 2, %s19
      %p163 = scmp.lt.s32.totalorder %s18, 1
      %s164 = scalar_select %p163, %s18, 1
      %p165 = scmp.lt.s32.totalorder %s162, 1
      %s166 = scalar_select %p165, %s162, 1
      %s167 = smul.addr %s164, 16
      %s168 = sadd.s32 %s166, %s167
      %s169 = smul.addr %s168, 8
      %s170 = scalar_lea.vmem %s0, %s169
      %p171 = pneg %p49
      %p172 = pneg %p46
      %p173 = pneg %p70
      %p174 = pneg %p67
      %p175 = pneg %p91
      %p176 = pneg %p88
      %p177 = pneg %p117
      %p178 = pneg %p114
      %p179 = scmp.lt.s32.totalorder %s18, 1
      %s180 = scalar_select %p179, %s18, 1
      %s181 = smul.addr %s180, 8
      %s182 = smul.addr %s181, 8
      %s183 = scalar_lea.vmem %s3, %s182
      %s184 = smul.u32 2, %s19
      %p185 = scmp.lt.s32.totalorder %s18, 1
      %s186 = scalar_select %p185, %s18, 1
      %p187 = scmp.lt.s32.totalorder %s184, 1
      %s188 = scalar_select %p187, %s184, 1
      %s189 = smul.addr %s186, 16
      %s190 = sadd.s32 %s188, %s189
      %s191 = smul.addr %s190, 8
      %s192 = scalar_lea.vmem %s0, %s191
      %s193 = smul.u32 2, %s19
      %p194 = scmp.lt.s32.totalorder %s18, 1
      %s195 = scalar_select %p194, %s18, 1
      %s196 = smul.addr %s195, 8
      %s197 = smul.addr %s196, 8
      %s198 = scalar_lea.vmem %s3, %s197
      %p199 = scmp.eq.s32.totalorder %s19, 0
      // Predicated region
      $region33: #{channel_attention.1} parent=31 // pred_check
        %p200 = pneg %p199
      $region34: #{channel_attention.1} parent=31 // pred_check_branch
        %202 = sbr.rel (%p200) target = $region36
      $region35: #{channel_attention.1} parent=31 // pred_region
        %vm203 = vcmask 7168
        %204 = vst.msk [vmem:[#allocation2] sm:$0xff] %vm203, 0.0
        %205 = vst.msk [vmem:[#allocation2 + $0x8] sm:$0xff] %vm203, 0.0
        %206 = vst.msk [vmem:[#allocation2 + $0x10] sm:$0xff] %vm203, 0.0
        %207 = vst.msk [vmem:[#allocation2 + $0x18] sm:$0xff] %vm203, 0.0
        %208 = vst.msk [vmem:[#allocation2 + $0x20] sm:$0xff] %vm203, 0.0
        %209 = vst.msk [vmem:[#allocation2 + $0x28] sm:$0xff] %vm203, 0.0
        %210 = vst.msk [vmem:[#allocation2 + $0x30] sm:$0xff] %vm203, 0.0
        %211 = vst.msk [vmem:[#allocation2 + $0x38] sm:$0xff] %vm203, 0.0
        %212 = vst.msk [vmem:[#allocation3] sm:$0xff] %vm203, -inf
        %213 = vst.msk [vmem:[#allocation3 + $0x8] sm:$0xff] %vm203, -inf
        %214 = vst.msk [vmem:[#allocation3 + $0x10] sm:$0xff] %vm203, -inf
        %215 = vst.msk [vmem:[#allocation3 + $0x18] sm:$0xff] %vm203, -inf
        %216 = vst.msk [vmem:[#allocation3 + $0x20] sm:$0xff] %vm203, -inf
        %217 = vst.msk [vmem:[#allocation3 + $0x28] sm:$0xff] %vm203, -inf
        %218 = vst.msk [vmem:[#allocation3 + $0x30] sm:$0xff] %vm203, -inf
        %219 = vst.msk [vmem:[#allocation3 + $0x38] sm:$0xff] %vm203, -inf
      $region36: #{channel_attention.1} parent=31 // pred_fallthru
        _
      %v220 = vld [vmem:[%s192] sm:$0xff]
      %v221 = vld [vmem:[%s192 + $0x8] sm:$0xff]
      %v222 = vld [vmem:[%s192 + $0x10] sm:$0xff]
      %v223 = vld [vmem:[%s192 + $0x18] sm:$0xff]
      %v224 = vld [vmem:[%s192 + $0x20] sm:$0xff]
      %v225 = vld [vmem:[%s192 + $0x28] sm:$0xff]
      %v226 = vld [vmem:[%s192 + $0x30] sm:$0xff]
      %v227 = vld [vmem:[%s192 + $0x38] sm:$0xff]
      %v228 = vld [vmem:[%s192 + $0x40] sm:$0xff]
      %v229 = vld [vmem:[%s192 + $0x48] sm:$0xff]
      %v230 = vld [vmem:[%s192 + $0x50] sm:$0xff]
      %v231 = vld [vmem:[%s192 + $0x58] sm:$0xff]
      %v232 = vld [vmem:[%s192 + $0x60] sm:$0xff]
      %v233 = vld [vmem:[%s192 + $0x68] sm:$0xff]
      %v234 = vld [vmem:[%s192 + $0x70] sm:$0xff]
      %v235 = vld [vmem:[%s192 + $0x78] sm:$0xff]
      %v236 = vld [vmem:[#allocation2] sm:$0xff]
      %v237 = vld [vmem:[#allocation2 + $0x8] sm:$0xff]
      %v238 = vld [vmem:[#allocation2 + $0x10] sm:$0xff]
      %v239 = vld [vmem:[#allocation2 + $0x18] sm:$0xff]
      %v240 = vld [vmem:[#allocation2 + $0x20] sm:$0xff]
      %v241 = vld [vmem:[#allocation2 + $0x28] sm:$0xff]
      %v242 = vld [vmem:[#allocation2 + $0x30] sm:$0xff]
      %v243 = vld [vmem:[#allocation2 + $0x38] sm:$0xff]
      %v244 = vadd.f32 %v220, %v221
      %245 = vadd.xlane.f32.xlu0 %v244
      %v246 = vpop.xlane.xlu0 %245
      %v247 = vadd.f32 %v222, %v223
      %248 = vadd.xlane.f32.xlu0 %v247
      %v249 = vpop.xlane.xlu0 %248
      %v250 = vadd.f32 %v224, %v225
      %251 = vadd.xlane.f32.xlu0 %v250
      %v252 = vpop.xlane.xlu0 %251
      %v253 = vadd.f32 %v226, %v227
      %254 = vadd.xlane.f32.xlu0 %v253
      %v255 = vpop.xlane.xlu0 %254
      %v256 = vadd.f32 %v228, %v229
      %257 = vadd.xlane.f32.xlu0 %v256
      %v258 = vpop.xlane.xlu0 %257
      %v259 = vadd.f32 %v230, %v231
      %260 = vadd.xlane.f32.xlu0 %v259
      %v261 = vpop.xlane.xlu0 %260
      %v262 = vadd.f32 %v232, %v233
      %263 = vadd.xlane.f32.xlu0 %v262
      %v264 = vpop.xlane.xlu0 %263
      %v265 = vadd.f32 %v234, %v235
      %266 = vadd.xlane.f32.xlu0 %v265
      %v267 = vpop.xlane.xlu0 %266
      %v268 = vadd.f32 %v236, %v246
      %v269 = vadd.f32 %v237, %v249
      %v270 = vadd.f32 %v238, %v252
      %v271 = vadd.f32 %v239, %v255
      %v272 = vadd.f32 %v240, %v258
      %v273 = vadd.f32 %v241, %v261
      %v274 = vadd.f32 %v242, %v264
      %v275 = vadd.f32 %v243, %v267
      %vm276 = vcmask 7168
      %277 = vst.msk [vmem:[#allocation2] sm:$0xff] %vm276, %v268
      %278 = vst.msk [vmem:[#allocation2 + $0x8] sm:$0xff] %vm276, %v269
      %279 = vst.msk [vmem:[#allocation2 + $0x10] sm:$0xff] %vm276, %v270
      %280 = vst.msk [vmem:[#allocation2 + $0x18] sm:$0xff] %vm276, %v271
      %281 = vst.msk [vmem:[#allocation2 + $0x20] sm:$0xff] %vm276, %v272
      %282 = vst.msk [vmem:[#allocation2 + $0x28] sm:$0xff] %vm276, %v273
      %283 = vst.msk [vmem:[#allocation2 + $0x30] sm:$0xff] %vm276, %v274
      %284 = vst.msk [vmem:[#allocation2 + $0x38] sm:$0xff] %vm276, %v275
      %v285 = vld [vmem:[#allocation3] sm:$0xff]
      %v286 = vld [vmem:[#allocation3 + $0x8] sm:$0xff]
      %v287 = vld [vmem:[#allocation3 + $0x10] sm:$0xff]
      %v288 = vld [vmem:[#allocation3 + $0x18] sm:$0xff]
      %v289 = vld [vmem:[#allocation3 + $0x20] sm:$0xff]
      %v290 = vld [vmem:[#allocation3 + $0x28] sm:$0xff]
      %v291 = vld [vmem:[#allocation3 + $0x30] sm:$0xff]
      %v292 = vld [vmem:[#allocation3 + $0x38] sm:$0xff]
      %v293 = vmax.f32 %v220, %v221
      %294 = vmax.xlane.f32.xlu0 %v293
      %v295 = vpop.xlane.xlu0 %294
      %v296 = vmax.f32 %v222, %v223
      %297 = vmax.xlane.f32.xlu0 %v296
      %v298 = vpop.xlane.xlu0 %297
      %v299 = vmax.f32 %v224, %v225
      %300 = vmax.xlane.f32.xlu0 %v299
      %v301 = vpop.xlane.xlu0 %300
      %v302 = vmax.f32 %v226, %v227
      %303 = vmax.xlane.f32.xlu0 %v302
      %v304 = vpop.xlane.xlu0 %303
      %v305 = vmax.f32 %v228, %v229
      %306 = vmax.xlane.f32.xlu0 %v305
      %v307 = vpop.xlane.xlu0 %306
      %v308 = vmax.f32 %v230, %v231
      %309 = vmax.xlane.f32.xlu0 %v308
      %v310 = vpop.xlane.xlu0 %309
      %v311 = vmax.f32 %v232, %v233
      %312 = vmax.xlane.f32.xlu0 %v311
      %v313 = vpop.xlane.xlu0 %312
      %v314 = vmax.f32 %v234, %v235
      %315 = vmax.xlane.f32.xlu0 %v314
      %v316 = vpop.xlane.xlu0 %315
      %v317 = vmax.f32 %v285, %v295
      %v318 = vmax.f32 %v286, %v298
      %v319 = vmax.f32 %v287, %v301
      %v320 = vmax.f32 %v288, %v304
      %v321 = vmax.f32 %v289, %v307
      %v322 = vmax.f32 %v290, %v310
      %v323 = vmax.f32 %v291, %v313
      %v324 = vmax.f32 %v292, %v316
      %325 = vst.msk [vmem:[#allocation3] sm:$0xff] %vm276, %v317
      %326 = vst.msk [vmem:[#allocation3 + $0x8] sm:$0xff] %vm276, %v318
      %327 = vst.msk [vmem:[#allocation3 + $0x10] sm:$0xff] %vm276, %v319
      %328 = vst.msk [vmem:[#allocation3 + $0x18] sm:$0xff] %vm276, %v320
      %329 = vst.msk [vmem:[#allocation3 + $0x20] sm:$0xff] %vm276, %v321
      %330 = vst.msk [vmem:[#allocation3 + $0x28] sm:$0xff] %vm276, %v322
      %331 = vst.msk [vmem:[#allocation3 + $0x30] sm:$0xff] %vm276, %v323
      %332 = vst.msk [vmem:[#allocation3 + $0x38] sm:$0xff] %vm276, %v324
      // Predicated region
      $region37: #{channel_attention.1} parent=31 // pred_check
        %p333 = pneg %p199
      $region38: #{channel_attention.1} parent=31 // pred_check_branch
        %335 = sbr.rel (%p333) target = $region40
      $region39: #{channel_attention.1} parent=31 // pred_region
        %v336 = vld [vmem:[#allocation2] sm:$0xff]
        %v337 = vld [vmem:[#allocation2 + $0x8] sm:$0xff]
        %v338 = vld [vmem:[#allocation2 + $0x10] sm:$0xff]
        %v339 = vld [vmem:[#allocation2 + $0x18] sm:$0xff]
        %v340 = vld [vmem:[#allocation2 + $0x20] sm:$0xff]
        %v341 = vld [vmem:[#allocation2 + $0x28] sm:$0xff]
        %v342 = vld [vmem:[#allocation2 + $0x30] sm:$0xff]
        %v343 = vld [vmem:[#allocation2 + $0x38] sm:$0xff]
        %v344 = vmul.f32 %v336, 0.00390625
        %v345 = vmul.f32 %v337, 0.00390625
        %v346 = vmul.f32 %v338, 0.00390625
        %v347 = vmul.f32 %v339, 0.00390625
        %v348 = vmul.f32 %v340, 0.00390625
        %v349 = vmul.f32 %v341, 0.00390625
        %v350 = vmul.f32 %v342, 0.00390625
        %v351 = vmul.f32 %v343, 0.00390625
        %v352 = vld [vmem:[#allocation3] sm:$0xff]
        %v353 = vld [vmem:[#allocation3 + $0x8] sm:$0xff]
        %v354 = vld [vmem:[#allocation3 + $0x10] sm:$0xff]
        %v355 = vld [vmem:[#allocation3 + $0x18] sm:$0xff]
        %v356 = vld [vmem:[#allocation3 + $0x20] sm:$0xff]
        %v357 = vld [vmem:[#allocation3 + $0x28] sm:$0xff]
        %v358 = vld [vmem:[#allocation3 + $0x30] sm:$0xff]
        %v359 = vld [vmem:[#allocation3 + $0x38] sm:$0xff]
        %368 = vrot.lane.b32.xlu0 %v352, 1
        %v369 = vpop.permute.xlu0 %368
        %370 = vrot.lane.b32.xlu0 %v353, 1
        %v371 = vpop.permute.xlu0 %370
        %372 = vrot.lane.b32.xlu0 %v354, 1
        %v373 = vpop.permute.xlu0 %372
        %374 = vrot.lane.b32.xlu0 %v355, 1
        %v375 = vpop.permute.xlu0 %374
        %376 = vrot.lane.b32.xlu0 %v356, 1
        %v377 = vpop.permute.xlu0 %376
        %378 = vrot.lane.b32.xlu0 %v357, 1
        %v379 = vpop.permute.xlu0 %378
        %380 = vrot.lane.b32.xlu0 %v358, 1
        %v381 = vpop.permute.xlu0 %380
        %382 = vrot.lane.b32.xlu0 %v359, 1
        %v383 = vpop.permute.xlu0 %382
        %v392 = vsel %vm276, %v344, %v369
        %v393 = vsel %vm276, %v345, %v371
        %v394 = vsel %vm276, %v346, %v373
        %v395 = vsel %vm276, %v347, %v375
        %v396 = vsel %vm276, %v348, %v377
        %v397 = vsel %vm276, %v349, %v379
        %v398 = vsel %vm276, %v350, %v381
        %v399 = vsel %vm276, %v351, %v383
        %v400 = vld [vmem:[%s1] sm:$0xf]
        %v401 = vld [vmem:[%s2] sm:$0xff]
        %v402 = vld [vmem:[%s2 + $0x8] sm:$0xff]
        %v403 = vld [vmem:[%s2 + $0x10] sm:$0xff]
        %v404 = vld [vmem:[%s2 + $0x18] sm:$0xff]
        %v405 = vld [vmem:[%s2 + $0x20] sm:$0xff]
        %v406 = vld [vmem:[%s2 + $0x28] sm:$0xff]
        %v407 = vld [vmem:[%s2 + $0x30] sm:$0xff]
        %v408 = vld [vmem:[%s2 + $0x38] sm:$0xff]
        %vm409 = vcmask 523264
        %v411 = vsel %vm409, %v400, 0
        %413 = vmatprep.subr.mxu0 0.0
        %414 = vmatpush1.msra.mxu0 %v392
        %415 = vmatprep.subr.mxu0 0.0
        %416 = vmatpush1.msra.mxu0 %v393
        %417 = vmatprep.subr.mxu0 0.0
        %418 = vmatpush1.msra.mxu0 %v394
        %419 = vmatprep.subr.mxu0 0.0
        %420 = vmatpush1.msra.mxu0 %v395
        %421 = vmatprep.subr.mxu0 0.0
        %422 = vmatpush1.msra.mxu0 %v396
        %423 = vmatprep.subr.mxu0 0.0
        %424 = vmatpush1.msra.mxu0 %v397
        %425 = vmatprep.subr.mxu0 0.0
        %426 = vmatpush1.msra.mxu0 %v398
        %427 = vmatprep.subr.mxu0 0.0
        %428 = vmatpush1.msra.mxu0 %v399
        %429 = vmatprep.subr.mxu0 0.0
        %430 = vmatpush1.msra.mxu0 0.0
        %431 = vmatprep.subr.mxu0 0.0
        %432 = vmatpush1.msra.mxu0 0.0
        %433 = vmatprep.subr.mxu0 0.0
        %434 = vmatpush1.msra.mxu0 0.0
        %435 = vmatprep.subr.mxu0 0.0
        %436 = vmatpush1.msra.mxu0 0.0
        %437 = vmatprep.subr.mxu0 0.0
        %438 = vmatpush1.msra.mxu0 0.0
        %439 = vmatprep.subr.mxu0 0.0
        %440 = vmatpush1.msra.mxu0 0.0
        %441 = vmatprep.subr.mxu0 0.0
        %442 = vmatpush1.msra.mxu0 0.0
        %443 = vmatprep.subr.mxu0 0.0
        %444 = vmatpush1.msra.mxu0 0.0
        %445 = vmatprep.subr.mxu0 0.0
        %446 = vmatpush1.msra.mxu0 0.0
        %447 = vmatprep.subr.mxu0 0.0
        %448 = vmatpush1.msra.mxu0 0.0
        %449 = vmatprep.subr.mxu0 0.0
        %450 = vmatpush1.msra.mxu0 0.0
        %451 = vmatprep.subr.mxu0 0.0
        %452 = vmatpush1.msra.mxu0 0.0
        %453 = vmatprep.subr.mxu0 0.0
        %454 = vmatpush1.msra.mxu0 0.0
        %455 = vmatprep.subr.mxu0 0.0
        %456 = vmatpush1.msra.mxu0 0.0
        %457 = vmatprep.subr.mxu0 0.0
        %458 = vmatpush1.msra.mxu0 0.0
        %459 = vmatprep.subr.mxu0 0.0
        %460 = vmatpush1.msra.mxu0 0.0
        %461 = vmatprep.subr.mxu0 0.0
        %462 = vmatpush1.msra.mxu0 0.0
        %463 = vmatprep.subr.mxu0 0.0
        %464 = vmatpush1.msra.mxu0 0.0
        %465 = vmatprep.subr.mxu0 0.0
        %466 = vmatpush1.msra.mxu0 0.0
        %467 = vmatprep.subr.mxu0 0.0
        %468 = vmatpush1.msra.mxu0 0.0
        %469 = vmatprep.subr.mxu0 0.0
        %470 = vmatpush1.msra.mxu0 0.0
        %471 = vmatprep.subr.mxu0 0.0
        %472 = vmatpush1.msra.mxu0 0.0
        %473 = vmatprep.subr.mxu0 0.0
        %474 = vmatpush1.msra.mxu0 0.0
        %475 = vmatprep.subr.mxu0 0.0
        %476 = vmatpush1.msra.mxu0 0.0
        %477 = vmatprep.mubr.f32.mxu0 0.0
        %478 = vmatmul.mubr.f32.gmra.mrb[0].mxu0 %v411
        %v479 = vpop.f32.mrb[0].mxu0
        %v480 = vadd.f32 0.0, %v479
        %v481 = vpop.f32.mrb[0].mxu0
        %482 = vdwg.mxu0
        %v483 = vmax.f32 %v480, 0.0
        %485 = vrot.lane.b32.xlu0 %v483, 127
        %v486 = vpop.permute.xlu0 %485
        %v488 = vadd.f32 %v483, %v486
        %vm489 = vcmask 31744
        %v491 = vsel %vm489, %v401, 0
        %v494 = vsel %vm489, %v402, 0
        %v497 = vsel %vm489, %v403, 0
        %v500 = vsel %vm489, %v404, 0
        %v503 = vsel %vm489, %v405, 0
        %v506 = vsel %vm489, %v406, 0
        %v509 = vsel %vm489, %v407, 0
        %v512 = vsel %vm489, %v408, 0
        %vm514 = vcmask 1043456
        %v516 = vsel %vm514, %v488, 0
        %518 = vmatprep.subr.mxu0 0.0
        %519 = vmatpush1.msra.mxu0 %v516
        %520 = vmatprep.subr.mxu0 0.0
        %521 = vmatpush1.msra.mxu0 0.0
        %522 = vmatprep.subr.mxu0 0.0
        %523 = vmatpush1.msra.mxu0 0.0
        %524 = vmatprep.subr.mxu0 0.0
        %525 = vmatpush1.msra.mxu0 0.0
        %526 = vmatprep.subr.mxu0 0.0
        %527 = vmatpush1.msra.mxu0 0.0
        %528 = vmatprep.subr.mxu0 0.0
        %529 = vmatpush1.msra.mxu0 0.0
        %530 = vmatprep.subr.mxu0 0.0
        %531 = vmatpush1.msra.mxu0 0.0
        %532 = vmatprep.subr.mxu0 0.0
        %533 = vmatpush1.msra.mxu0 0.0
        %534 = vmatprep.subr.mxu0 0.0
        %535 = vmatpush1.msra.mxu0 0.0
        %536 = vmatprep.subr.mxu0 0.0
        %537 = vmatpush1.msra.mxu0 0.0
        %538 = vmatprep.subr.mxu0 0.0
        %539 = vmatpush1.msra.mxu0 0.0
        %540 = vmatprep.subr.mxu0 0.0
        %541 = vmatpush1.msra.mxu0 0.0
        %542 = vmatprep.subr.mxu0 0.0
        %543 = vmatpush1.msra.mxu0 0.0
        %544 = vmatprep.subr.mxu0 0.0
        %545 = vmatpush1.msra.mxu0 0.0
        %546 = vmatprep.subr.mxu0 0.0
        %547 = vmatpush1.msra.mxu0 0.0
        %548 = vmatprep.subr.mxu0 0.0
        %549 = vmatpush1.msra.mxu0 0.0
        %550 = vmatprep.subr.mxu0 0.0
        %551 = vmatpush1.msra.mxu0 0.0
        %552 = vmatprep.subr.mxu0 0.0
        %553 = vmatpush1.msra.mxu0 0.0
        %554 = vmatprep.subr.mxu0 0.0
        %555 = vmatpush1.msra.mxu0 0.0
        %556 = vmatprep.subr.mxu0 0.0
        %557 = vmatpush1.msra.mxu0 0.0
        %558 = vmatprep.subr.mxu0 0.0
        %559 = vmatpush1.msra.mxu0 0.0
        %560 = vmatprep.subr.mxu0 0.0
        %561 = vmatpush1.msra.mxu0 0.0
        %562 = vmatprep.subr.mxu0 0.0
        %563 = vmatpush1.msra.mxu0 0.0
        %564 = vmatprep.subr.mxu0 0.0
        %565 = vmatpush1.msra.mxu0 0.0
        %566 = vmatprep.subr.mxu0 0.0
        %567 = vmatpush1.msra.mxu0 0.0
        %568 = vmatprep.subr.mxu0 0.0
        %569 = vmatpush1.msra.mxu0 0.0
        %570 = vmatprep.subr.mxu0 0.0
        %571 = vmatpush1.msra.mxu0 0.0
        %572 = vmatprep.subr.mxu0 0.0
        %573 = vmatpush1.msra.mxu0 0.0
        %574 = vmatprep.subr.mxu0 0.0
        %575 = vmatpush1.msra.mxu0 0.0
        %576 = vmatprep.subr.mxu0 0.0
        %577 = vmatpush1.msra.mxu0 0.0
        %578 = vmatprep.subr.mxu0 0.0
        %579 = vmatpush1.msra.mxu0 0.0
        %580 = vmatprep.subr.mxu0 0.0
        %581 = vmatpush1.msra.mxu0 0.0
        %582 = vmatprep.mubr.f32.mxu0 0.0
        %583 = vmatmul.mubr.f32.gmra.mrb[0].mxu0 %v491
        %v584 = vpop.f32.mrb[0].mxu0
        %v585 = vadd.f32 0.0, %v584
        %v586 = vpop.f32.mrb[0].mxu0
        %587 = vmatprep.mubr.f32.mxu0 0.0
        %588 = vmatmul.mubr.f32.gmra.mrb[0].mxu0 %v494
        %v589 = vpop.f32.mrb[0].mxu0
        %v590 = vadd.f32 0.0, %v589
        %v591 = vpop.f32.mrb[0].mxu0
        %592 = vmatprep.mubr.f32.mxu0 0.0
        %593 = vmatmul.mubr.f32.gmra.mrb[0].mxu0 %v497
        %v594 = vpop.f32.mrb[0].mxu0
        %v595 = vadd.f32 0.0, %v594
        %v596 = vpop.f32.mrb[0].mxu0
        %597 = vmatprep.mubr.f32.mxu0 0.0
        %598 = vmatmul.mubr.f32.gmra.mrb[0].mxu0 %v500
        %v599 = vpop.f32.mrb[0].mxu0
        %v600 = vadd.f32 0.0, %v599
        %v601 = vpop.f32.mrb[0].mxu0
        %602 = vmatprep.mubr.f32.mxu0 0.0
        %603 = vmatmul.mubr.f32.gmra.mrb[0].mxu0 %v503
        %v604 = vpop.f32.mrb[0].mxu0
        %v605 = vadd.f32 0.0, %v604
        %v606 = vpop.f32.mrb[0].mxu0
        %607 = vmatprep.mubr.f32.mxu0 0.0
        %608 = vmatmul.mubr.f32.gmra.mrb[0].mxu0 %v506
        %v609 = vpop.f32.mrb[0].mxu0
        %v610 = vadd.f32 0.0, %v609
        %v611 = vpop.f32.mrb[0].mxu0
        %612 = vmatprep.mubr.f32.mxu0 0.0
        %613 = vmatmul.mubr.f32.gmra.mrb[0].mxu0 %v509
        %v614 = vpop.f32.mrb[0].mxu0
        %v615 = vadd.f32 0.0, %v614
        %v616 = vpop.f32.mrb[0].mxu0
        %617 = vmatprep.mubr.f32.mxu0 0.0
        %618 = vmatmul.mubr.f32.gmra.mrb[0].mxu0 %v512
        %v619 = vpop.f32.mrb[0].mxu0
        %v620 = vadd.f32 0.0, %v619
        %v621 = vpop.f32.mrb[0].mxu0
        %622 = vdwg.mxu0
        %v623 = vsub.f32 0.0, %v585
        %v624 = vsub.f32 0.0, %v590
        %v625 = vsub.f32 0.0, %v595
        %v626 = vsub.f32 0.0, %v600
        %v627 = vsub.f32 0.0, %v605
        %v628 = vsub.f32 0.0, %v610
        %v629 = vsub.f32 0.0, %v615
        %v630 = vsub.f32 0.0, %v620
        %v631 = vmul.f32 %v623, 1.442695
        %v632 = vpow.pop %v631
        %v633 = vmul.f32 %v624, 1.442695
        %v634 = vpow.pop %v633
        %v635 = vmul.f32 %v625, 1.442695
        %v636 = vpow.pop %v635
        %v637 = vmul.f32 %v626, 1.442695
        %v638 = vpow.pop %v637
        %v639 = vmul.f32 %v627, 1.442695
        %v640 = vpow.pop %v639
        %v641 = vmul.f32 %v628, 1.442695
        %v642 = vpow.pop %v641
        %v643 = vmul.f32 %v629, 1.442695
        %v644 = vpow.pop %v643
        %v645 = vmul.f32 %v630, 1.442695
        %v646 = vpow.pop %v645
        %v647 = vadd.f32 %v632, 1.0
        %v648 = vadd.f32 %v634, 1.0
        %v649 = vadd.f32 %v636, 1.0
        %v650 = vadd.f32 %v638, 1.0
        %v651 = vadd.f32 %v640, 1.0
        %v652 = vadd.f32 %v642, 1.0
        %v653 = vadd.f32 %v644, 1.0
        %v654 = vadd.f32 %v646, 1.0
        %v655 = vrcp.pop %v647
        %v656 = vmul.f32 1.0, %v655
        %v657 = vrcp.pop %v648
        %v658 = vmul.f32 1.0, %v657
        %v659 = vrcp.pop %v649
        %v660 = vmul.f32 1.0, %v659
        %v661 = vrcp.pop %v650
        %v662 = vmul.f32 1.0, %v661
        %v663 = vrcp.pop %v651
        %v664 = vmul.f32 1.0, %v663
        %v665 = vrcp.pop %v652
        %v666 = vmul.f32 1.0, %v665
        %v667 = vrcp.pop %v653
        %v668 = vmul.f32 1.0, %v667
        %v669 = vrcp.pop %v654
        %v670 = vmul.f32 1.0, %v669
        %671 = vst.msk [vmem:[%s198] sm:$0xff] %vm276, %v656
        %672 = vst.msk [vmem:[%s198 + $0x8] sm:$0xff] %vm276, %v658
        %673 = vst.msk [vmem:[%s198 + $0x10] sm:$0xff] %vm276, %v660
        %674 = vst.msk [vmem:[%s198 + $0x18] sm:$0xff] %vm276, %v662
        %675 = vst.msk [vmem:[%s198 + $0x20] sm:$0xff] %vm276, %v664
        %676 = vst.msk [vmem:[%s198 + $0x28] sm:$0xff] %vm276, %v666
        %677 = vst.msk [vmem:[%s198 + $0x30] sm:$0xff] %vm276, %v668
        %678 = vst.msk [vmem:[%s198 + $0x38] sm:$0xff] %vm276, %v670
      $region40: #{channel_attention.1} parent=31 // pred_fallthru
        _
      %p679 = scmp.lt.s32.totalorder %s18, 1
      %s680 = scalar_select %p679, %s18, 1
      %s681 = smul.addr %s680, 8
      %s682 = smul.addr %s681, 8
      %s683 = scalar_lea.vmem %s3, %s682
      // Predicated region
      $region41: #{channel_attention.1} parent=31 // pred_check
        %p684 = pneg %p114
      $region42: #{channel_attention.1} parent=31 // pred_check_branch
        %686 = sbr.rel (%p684) target = $region44
      $region43: #{channel_attention.1} parent=31 // pred_region
        _
      $region44: #{channel_attention.1} parent=31 // pred_fallthru
        _
    $region32: #{channel_attention.1} parent=5 // pred_fallthru
      _
    %p687 = scmp.le.s32.totalorder 2, %s9
    // Predicated region
    $region45: #{channel_attention.1} parent=5 // pred_check
      %p688 = pneg %p687
    $region46: #{channel_attention.1} parent=5 // pred_check_branch
      %690 = sbr.rel (%p688) target = $region48
    $region47: #{channel_attention.1} parent=5 // pred_region
      %s691 = ssub.s32 %s9, 2
      // Predicated region
      $region49: #{channel_attention.1} parent=47 // pred_check
        %p692 = pneg %p120
      $region50: #{channel_attention.1} parent=47 // pred_check_branch
        %694 = sbr.rel (%p692) target = $region52
      $region51: #{channel_attention.1} parent=47 // pred_region
        %p695 = scmp.lt.s32.totalorder %s20, 1
        %s696 = scalar_select %p695, %s20, 1
        %s697 = smul.addr %s696, 8
        %s698 = smul.addr %s697, 8
        %s699 = scalar_lea.vmem %s3, %s698
      $region52: #{channel_attention.1} parent=47 // pred_fallthru
        _
    $region48: #{channel_attention.1} parent=5 // pred_fallthru
      _
  $region6: #{channel_attention.1} parent=0 // loop_footer
    %s13 = sadd.s32 1, %s9
  $region7: #{channel_attention.1} parent=0 // loop_footer_branch
    %8 = sbr.rel target = $region3
  $region8: #{channel_attention.1} parent=0 // loop_exit
    _

</llo_original>
